<compile_context>
chip_gen: v7x
topology: tpu7x:2x2x1
jax: 0.10.0
libtpu: 0.0.40
codegen_flags: <defaults>
</compile_context>

<pallas_src>
import jax
import jax.numpy as jnp
from jax.experimental import pallas as pl
from jax.experimental.pallas import tpu as pltpu

IN_F = 28 * 28          # 784
HID = 100               # real hidden width
NCLS = 10               # real number of classes
HID_P = 128             # lane-padded hidden width
CLS_P = 128             # lane-padded class width


def _round_up(x, m):
    return ((x + m - 1) // m) * m


def mlp_kernel(x_ref, w1_ref, b1_ref, w2_ref, b2_ref, w3_ref, b3_ref, o_ref):
    # In-register f32 -> bf16 cast of the input tile (avoids a wrapper-side
    # HBM cast pass; the VALU has plenty of slack in this DMA-bound kernel).
    xb = x_ref[...].astype(jnp.bfloat16)

    # fc1 + bias + ReLU   (bf16 x bf16 -> f32 accumulate)
    h1 = jnp.dot(xb, w1_ref[...], preferred_element_type=jnp.float32)
    h1 = jnp.maximum(h1 + b1_ref[...], 0.0)
    # dropout -> identity (eval mode)

    # fc2 + bias + ReLU
    h2 = jnp.dot(h1.astype(jnp.bfloat16), w2_ref[...],
                 preferred_element_type=jnp.float32)
    h2 = jnp.maximum(h2 + b2_ref[...], 0.0)
    # dropout -> identity (eval mode)

    # fc3 + bias + ReLU
    h3 = jnp.dot(h2.astype(jnp.bfloat16), w3_ref[...],
                 preferred_element_type=jnp.float32)
    h3 = jnp.maximum(h3 + b3_ref[...], 0.0)

    # softmax over the 10 real class lanes; padded lanes masked to -inf so
    # they contribute exp(-inf) = 0 to the denominator and store as 0.
    lane = jax.lax.broadcasted_iota(jnp.int32, h3.shape, 1)
    h3 = jnp.where(lane < NCLS, h3, -jnp.inf)
    m = jnp.max(h3, axis=1, keepdims=True)
    e = jnp.exp(h3 - m)
    inv = pl.reciprocal(jnp.sum(e, axis=1, keepdims=True), approx=True)
    o_ref[...] = (e * inv).astype(o_ref.dtype)


def prepare_params(params):
    """Pad feature dims to 128 lanes and cast weights to bf16 (biases stay f32)."""
    w1, b1, w2, b2, w3, b3 = params

    def pad_to(a, rows, cols):
        out = jnp.zeros((rows, cols), jnp.float32)
        return out.at[: a.shape[0], : a.shape[1]].set(a)

    w1p = pad_to(w1, IN_F, HID_P).astype(jnp.bfloat16)
    b1p = pad_to(b1, 1, HID_P)
    w2p = pad_to(w2, HID_P, HID_P).astype(jnp.bfloat16)
    b2p = pad_to(b2, 1, HID_P)
    w3p = pad_to(w3, HID_P, CLS_P).astype(jnp.bfloat16)
    b3p = pad_to(b3, 1, CLS_P)
    return (w1p, b1p, w2p, b2p, w3p, b3p)


def net_forward(x_nchw, params, tb=1024):
    """x_nchw: (B, 1, 28, 28) float32 -> (B, 10) softmax probabilities (bf16)."""
    w1, b1, w2, b2, w3, b3 = prepare_params(params)

    B = x_nchw.shape[0]
    # x.view(-1, 28*28): reshape is free; input stays f32 (cast happens in-kernel).
    x = x_nchw.reshape(B, IN_F).astype(jnp.float32)

    # Batch tiling: TB multiple of 16 (bf16 sublane packing), adaptive for small
    # B; no wrapper-side jnp.pad -- the last grid block may be partial and its
    # out-of-bounds rows are discarded on writeback.
    TB = min(tb, _round_up(B, 16))
    grid = (pl.cdiv(B, TB),)

    resident = lambda shape: pl.BlockSpec(shape, lambda i: (0, 0))

    cost = pl.CostEstimate(
        flops=2 * B * (IN_F * HID_P + HID_P * HID_P + HID_P * CLS_P),
        transcendentals=B * CLS_P,
        bytes_accessed=(B * IN_F * 4                              # x (f32)
                        + (w1.size + w2.size + w3.size) * 2       # bf16 weights
                        + (b1.size + b2.size + b3.size) * 4       # f32 biases
                        + B * CLS_P * 2),                         # bf16 output
    )

    out = pl.pallas_call(
        mlp_kernel,
        out_shape=jax.ShapeDtypeStruct((B, CLS_P), jnp.bfloat16),
        grid=grid,
        in_specs=[
            pl.BlockSpec((TB, IN_F), lambda i: (i, 0)),      # x: tiled over batch
            resident((IN_F, HID_P)),                         # W1 (VMEM resident)
            resident((1, HID_P)),                            # b1
            resident((HID_P, HID_P)),                        # W2
            resident((1, HID_P)),                            # b2
            resident((HID_P, CLS_P)),                        # W3
            resident((1, CLS_P)),                            # b3
        ],
        out_specs=pl.BlockSpec((TB, CLS_P), lambda i: (i, 0)),  # lane-dense store
        compiler_params=pltpu.CompilerParams(
            dimension_semantics=("parallel",),   # megacore sharding of batch on v7x
            vmem_limit_bytes=48 * 1024 * 1024,   # safe on v5e/v6e/v7x; allows tb sweep
        ),
        cost_estimate=cost,
    )(x, w1, b1, w2, b2, w3, b3)

    return out[:, :NCLS]


def net_reference(x_nchw, params):
    """Pure-JAX f32 reference of the PyTorch forward (eval-mode dropout)."""
    w1, b1, w2, b2, w3, b3 = params
    h = x_nchw.reshape(x_nchw.shape[0], IN_F).astype(jnp.float32)
    h = jnp.maximum(h @ w1 + b1, 0.0)
    h = jnp.maximum(h @ w2 + b2, 0.0)
    h = jnp.maximum(h @ w3 + b3, 0.0)
    return jax.nn.softmax(h, axis=1)


def init_params(key):
    """Deterministic params matching nn.Linear shapes (stored transposed: (in, out))."""
    k1, k2, k3, k4, k5, k6 = jax.random.split(key, 6)

    def uniform(k, shape, fan_in):
        bound = 1.0 / (fan_in ** 0.5)
        return jax.random.uniform(k, shape, jnp.float32, -bound, bound)

    # fc1: Linear(784, 100) -> W^T is (784, 100)
    w1 = uniform(k1, (IN_F, HID), IN_F)
    b1 = uniform(k2, (1, HID), IN_F)
    # fc2: Linear(100, 100)
    w2 = uniform(k3, (HID, HID), HID)
    b2 = uniform(k4, (1, HID), HID)
    # fc3: Linear(100, 10)
    w3 = uniform(k5, (HID, NCLS), HID)
    b3 = uniform(k6, (1, NCLS), HID)
    return (w1, b1, w2, b2, w3, b3)


if __name__ == "__main__":
    key = jax.random.PRNGKey(0)
    kx, kp = jax.random.split(key)

    params = init_params(kp)
    # MNIST-like input: batch=8, NCHW (8, 1, 28, 28)
    x = jax.random.normal(kx, (8, 1, 28, 28), dtype=jnp.float32)

    out = net_forward(x, params)
    out = jax.block_until_ready(out)

    assert out.shape == (8, 10)
    out_f32 = out.astype(jnp.float32)
    # softmax rows sum to ~1 (bf16 output quantization tolerance)
    assert jnp.allclose(jnp.sum(out_f32, axis=1), 1.0, atol=3e-2)
    # all probabilities non-negative
    assert bool(jnp.all(out_f32 >= 0.0))
    # matches the f32 reference within bf16-weight tolerance
    ref = net_reference(x, params)
    assert jnp.allclose(out_f32, ref, atol=5e-2)
    print("KERNEL_OK")
</pallas_src>

<mosaic_0001>
module attributes {stable_mosaic.version = 11 : i64} {
  func.func @mlp_kernel(%arg0: i32, %arg1: memref<16x784xf32, #tpu.memory_space<vmem>>, %arg2: memref<784x128xbf16, #tpu.memory_space<vmem>>, %arg3: memref<1x128xf32, #tpu.memory_space<vmem>>, %arg4: memref<128x128xbf16, #tpu.memory_space<vmem>>, %arg5: memref<1x128xf32, #tpu.memory_space<vmem>>, %arg6: memref<128x128xbf16, #tpu.memory_space<vmem>>, %arg7: memref<1x128xf32, #tpu.memory_space<vmem>>, %arg8: memref<16x128xbf16, #tpu.memory_space<vmem>>) attributes {dimension_semantics = [#tpu.dimension_semantics<parallel>], iteration_bounds = array<i64: 1>, scalar_prefetch = 0 : i64, scratch_operands = 0 : i64, tpu.core_type = #tpu.core_type<tc>, window_params = [{transform_indices = @transform_0, window_bounds = array<i64: 16, 784>}, {pipeline_mode = #tpu.pipeline_mode<synchronous>, transform_indices = @transform_1, window_bounds = array<i64: 784, 128>}, {pipeline_mode = #tpu.pipeline_mode<synchronous>, transform_indices = @transform_2, window_bounds = array<i64: 1, 128>}, {pipeline_mode = #tpu.pipeline_mode<synchronous>, transform_indices = @transform_3, window_bounds = array<i64: 128, 128>}, {pipeline_mode = #tpu.pipeline_mode<synchronous>, transform_indices = @transform_4, window_bounds = array<i64: 1, 128>}, {pipeline_mode = #tpu.pipeline_mode<synchronous>, transform_indices = @transform_5, window_bounds = array<i64: 128, 128>}, {pipeline_mode = #tpu.pipeline_mode<synchronous>, transform_indices = @transform_6, window_bounds = array<i64: 1, 128>}, {transform_indices = @transform_7, window_bounds = array<i64: 16, 128>}]} {
    %c0 = arith.constant 0 : index
    %c0_0 = arith.constant 0 : index
    %0 = vector.load %arg1[%c0, %c0_0] : memref<16x784xf32, #tpu.memory_space<vmem>>, vector<16x784xf32>
    %1 = arith.truncf %0 : vector<16x784xf32> to vector<16x784xbf16>
    %c0_1 = arith.constant 0 : index
    %c0_2 = arith.constant 0 : index
    %2 = vector.load %arg2[%c0_1, %c0_2] : memref<784x128xbf16, #tpu.memory_space<vmem>>, vector<784x128xbf16>
    %cst = arith.constant dense<0.000000e+00> : vector<16x128xf32>
    %3 = tpu.matmul %1, %2, %cst {dimension_numbers = #tpu.dot_dimension_numbers<[1], [0], [0], [1], [0, 0, 1, 1], [], []>} : vector<16x784xbf16>, vector<784x128xbf16>, vector<16x128xf32> -> vector<16x128xf32>
    %c0_3 = arith.constant 0 : index
    %c0_4 = arith.constant 0 : index
    %4 = vector.load %arg3[%c0_3, %c0_4] : memref<1x128xf32, #tpu.memory_space<vmem>>, vector<1x128xf32>
    %5 = vector.broadcast %4 : vector<1x128xf32> to vector<16x128xf32>
    %6 = arith.addf %3, %5 : vector<16x128xf32>
    %cst_5 = arith.constant 0.000000e+00 : f32
    %7 = vector.broadcast %cst_5 : f32 to vector<16x128xf32>
    %8 = arith.maximumf %6, %7 : vector<16x128xf32>
    %9 = arith.truncf %8 : vector<16x128xf32> to vector<16x128xbf16>
    %c0_6 = arith.constant 0 : index
    %c0_7 = arith.constant 0 : index
    %10 = vector.load %arg4[%c0_6, %c0_7] : memref<128x128xbf16, #tpu.memory_space<vmem>>, vector<128x128xbf16>
    %cst_8 = arith.constant dense<0.000000e+00> : vector<16x128xf32>
    %11 = tpu.matmul %9, %10, %cst_8 {dimension_numbers = #tpu.dot_dimension_numbers<[1], [0], [0], [1], [0, 0, 1, 1], [], []>} : vector<16x128xbf16>, vector<128x128xbf16>, vector<16x128xf32> -> vector<16x128xf32>
    %c0_9 = arith.constant 0 : index
    %c0_10 = arith.constant 0 : index
    %12 = vector.load %arg5[%c0_9, %c0_10] : memref<1x128xf32, #tpu.memory_space<vmem>>, vector<1x128xf32>
    %13 = vector.broadcast %12 : vector<1x128xf32> to vector<16x128xf32>
    %14 = arith.addf %11, %13 : vector<16x128xf32>
    %cst_11 = arith.constant 0.000000e+00 : f32
    %15 = vector.broadcast %cst_11 : f32 to vector<16x128xf32>
    %16 = arith.maximumf %14, %15 : vector<16x128xf32>
    %17 = arith.truncf %16 : vector<16x128xf32> to vector<16x128xbf16>
    %c0_12 = arith.constant 0 : index
    %c0_13 = arith.constant 0 : index
    %18 = vector.load %arg6[%c0_12, %c0_13] : memref<128x128xbf16, #tpu.memory_space<vmem>>, vector<128x128xbf16>
    %cst_14 = arith.constant dense<0.000000e+00> : vector<16x128xf32>
    %19 = tpu.matmul %17, %18, %cst_14 {dimension_numbers = #tpu.dot_dimension_numbers<[1], [0], [0], [1], [0, 0, 1, 1], [], []>} : vector<16x128xbf16>, vector<128x128xbf16>, vector<16x128xf32> -> vector<16x128xf32>
    %c0_15 = arith.constant 0 : index
    %c0_16 = arith.constant 0 : index
    %20 = vector.load %arg7[%c0_15, %c0_16] : memref<1x128xf32, #tpu.memory_space<vmem>>, vector<1x128xf32>
    %21 = vector.broadcast %20 : vector<1x128xf32> to vector<16x128xf32>
    %22 = arith.addf %19, %21 : vector<16x128xf32>
    %cst_17 = arith.constant 0.000000e+00 : f32
    %23 = vector.broadcast %cst_17 : f32 to vector<16x128xf32>
    %24 = arith.maximumf %22, %23 : vector<16x128xf32>
    %25 = tpu.iota {dimensions = array<i32: 1>} : vector<16x128xi32>
    %c10_i32 = arith.constant 10 : i32
    %26 = vector.broadcast %c10_i32 : i32 to vector<16x128xi32>
    %27 = arith.cmpi slt, %25, %26 : vector<16x128xi32>
    %cst_18 = arith.constant 0xFF800000 : f32
    %28 = vector.broadcast %cst_18 : f32 to vector<16x128xf32>
    %29 = arith.select %27, %24, %28 : vector<16x128xi1>, vector<16x128xf32>
    %cst_19 = arith.constant dense<0xFF800000> : vector<16xf32>
    %30 = vector.multi_reduction <maximumf>, %29, %cst_19 [1] : vector<16x128xf32> to vector<16xf32>
    %31 = vector.shape_cast %30 : vector<16xf32> to vector<16x1xf32>
    %32 = vector.broadcast %31 : vector<16x1xf32> to vector<16x128xf32>
    %33 = arith.subf %29, %32 : vector<16x128xf32>
    %34 = math.exp %33 : vector<16x128xf32>
    %cst_20 = arith.constant dense<0.000000e+00> : vector<16xf32>
    %35 = vector.multi_reduction <add>, %34, %cst_20 [1] : vector<16x128xf32> to vector<16xf32>
    %36 = vector.shape_cast %35 : vector<16xf32> to vector<16x1xf32>
    %37 = tpu.reciprocal %36 {approx = true} : vector<16x1xf32> -> vector<16x1xf32>
    %38 = vector.broadcast %37 : vector<16x1xf32> to vector<16x128xf32>
    %39 = arith.mulf %34, %38 : vector<16x128xf32>
    %40 = arith.truncf %39 : vector<16x128xf32> to vector<16x128xbf16>
    %c0_21 = arith.constant 0 : index
    %c0_22 = arith.constant 0 : index
    %41 = vector.load %arg8[%c0_21, %c0_22] : memref<16x128xbf16, #tpu.memory_space<vmem>>, vector<16x128xbf16>
    tpu.vector_store %arg8[%c0_21, %c0_22], %40 {strides = array<i32>} : memref<16x128xbf16, #tpu.memory_space<vmem>>, vector<16x128xbf16>,
    return
  }
  func.func @transform_0(%arg0: i32) -> (i32, i32) {
    %c0_i32 = arith.constant 0 : i32
    %c0_i32_0 = arith.constant 0 : i32
    return %arg0, %c0_i32 : i32, i32
  }
  func.func @transform_1(%arg0: i32) -> (i32, i32) {
    %c0_i32 = arith.constant 0 : i32
    %c0_i32_0 = arith.constant 0 : i32
    %c0_i32_1 = arith.constant 0 : i32
    return %c0_i32, %c0_i32_0 : i32, i32
  }
  func.func @transform_2(%arg0: i32) -> (i32, i32) {
    %c0_i32 = arith.constant 0 : i32
    %c0_i32_0 = arith.constant 0 : i32
    %c0_i32_1 = arith.constant 0 : i32
    return %c0_i32, %c0_i32_0 : i32, i32
  }
  func.func @transform_3(%arg0: i32) -> (i32, i32) {
    %c0_i32 = arith.constant 0 : i32
    %c0_i32_0 = arith.constant 0 : i32
    %c0_i32_1 = arith.constant 0 : i32
    return %c0_i32, %c0_i32_0 : i32, i32
  }
  func.func @transform_4(%arg0: i32) -> (i32, i32) {
    %c0_i32 = arith.constant 0 : i32
    %c0_i32_0 = arith.constant 0 : i32
    %c0_i32_1 = arith.constant 0 : i32
    return %c0_i32, %c0_i32_0 : i32, i32
  }
  func.func @transform_5(%arg0: i32) -> (i32, i32) {
    %c0_i32 = arith.constant 0 : i32
    %c0_i32_0 = arith.constant 0 : i32
    %c0_i32_1 = arith.constant 0 : i32
    return %c0_i32, %c0_i32_0 : i32, i32
  }
  func.func @transform_6(%arg0: i32) -> (i32, i32) {
    %c0_i32 = arith.constant 0 : i32
    %c0_i32_0 = arith.constant 0 : i32
    %c0_i32_1 = arith.constant 0 : i32
    return %c0_i32, %c0_i32_0 : i32, i32
  }
  func.func @transform_7(%arg0: i32) -> (i32, i32) {
    %c0_i32 = arith.constant 0 : i32
    %c0_i32_0 = arith.constant 0 : i32
    return %arg0, %c0_i32 : i32, i32
  }
}

</mosaic_0001>

<llo_original>
// kernel: tpu_custom_call.1
$region0: #{tpu_custom_call.1}
  #allocation0 [shape = 'u32[]', space=smem, size = 0x4, offset = 0x4, fixed_abs, tag = 'smem constant byte address 0x4 - core index']
  #allocation1 [shape = 'u32[144,128]{1,0:T(1,128)}', space=vmem, size = 0x12000, scoped, tag = 'internal scratch']
  %s0 = inlined_call_operand.hbm [shape: f32[8,784], index: 0, kind: input, shape index: {}]
  %s1 = inlined_call_operand.hbm [shape: bf16[784,128], index: 1, kind: input, shape index: {}]
  %s2 = inlined_call_operand.vmem [shape: f32[1,128], index: 2, kind: input, shape index: {}]
  %s3 = inlined_call_operand.hbm [shape: bf16[128,128], index: 3, kind: input, shape index: {}]
  %s4 = inlined_call_operand.vmem [shape: f32[1,128], index: 4, kind: input, shape index: {}]
  %s5 = inlined_call_operand.hbm [shape: bf16[128,128], index: 5, kind: input, shape index: {}]
  %s6 = inlined_call_operand.vmem [shape: f32[1,128], index: 6, kind: input, shape index: {}]
  %s7 = inlined_call_operand.hbm [shape: bf16[8,128], index: 7, kind: output, shape index: {}]
  %s8 = sld [smem:[#allocation0]]
  $region54: #{tpu_custom_call.1} parent=0
    _
  %s10 = ssub.s32 1, %s8
  %s11 = scalar_select 0, %s10, %s8
  $region1: #{tpu_custom_call.1} parent=0
    #allocation2 [shape = 'u8[57344]{0}', space=vmem, size = 0xe000, scoped, tag = 'input window, operand 0, single buffered']
    #allocation3 [shape = 's32[1]{0}', space=sflag, size = 0x4, scoped, tag = 'scoped memory for tpu_custom_call.1']
    #allocation4 [shape = 's32[1]{0}', space=sflag, size = 0x4, scoped, tag = 'scoped memory for tpu_custom_call.1']
    #allocation5 [shape = 'u8[200704]{0}', space=vmem, size = 0x31000, scoped, tag = 'input window, operand 1, single buffered']
    #allocation6 [shape = 's32[1]{0}', space=sflag, size = 0x4, scoped, tag = 'scoped memory for tpu_custom_call.1']
    #allocation7 [shape = 'u8[32768]{0}', space=vmem, size = 0x8000, scoped, tag = 'input window, operand 3, single buffered']
    #allocation8 [shape = 'u8[32768]{0}', space=vmem, size = 0x8000, scoped, tag = 'input window, operand 5, single buffered']
    #allocation9 [shape = 's32[1]{0}', space=sflag, size = 0x4, scoped, tag = 'scoped memory for tpu_custom_call.1']
    #allocation10 [shape = 'u8[4096]{0}', space=vmem, size = 0x1000, scoped, tag = 'output window, operand 0, single buffered']
    %12 = vsyncpa [#allocation3], 0
    %13 = vsyncpa [#allocation6], 0
    %14 = vsyncpa [#allocation9], 0
    %15 = vsyncpa [#allocation4], 0
    // Predicated region
    $region2: #{tpu_custom_call.1} parent=1 // pred_check
      _
    $region3: #{tpu_custom_call.1} parent=1 // pred_check_branch
      %17 = sbr.rel (0) target = $region5
    $region4: #{tpu_custom_call.1} parent=1 // pred_region
      %s19 = ssub.s32 1792, 896
      %20 = vsyncadd [#allocation3], %s19
      %s21 = sshll.u32 [#allocation2], 4
      %s22 = int_to_ptr.vmem [resolvable:$true] %s21
      %27 = dma.hbm_to_vmem [thread:$0]  %s0, 896, %s22, [#allocation3], 896, 896, 56
    $region5: #{tpu_custom_call.1} parent=1 // pred_fallthru
      _
    // Predicated region
    $region6: #{tpu_custom_call.1} parent=1 // pred_check
      _
    $region7: #{tpu_custom_call.1} parent=1 // pred_check_branch
      %29 = sbr.rel (0) target = $region9
    $region8: #{tpu_custom_call.1} parent=1 // pred_region
      %s31 = ssub.s32 6272, 6272
      %32 = vsyncadd [#allocation6], %s31
      %s33 = sshll.u32 [#allocation5], 4
      %s34 = int_to_ptr.vmem [resolvable:$true] %s33
      %39 = dma.hbm_to_vmem [thread:$0]  %s1, 6272, %s34, [#allocation6], 64, 64, 4
    $region9: #{tpu_custom_call.1} parent=1 // pred_fallthru
      _
    // Predicated region
    $region10: #{tpu_custom_call.1} parent=1 // pred_check
      _
    $region11: #{tpu_custom_call.1} parent=1 // pred_check_branch
      %41 = sbr.rel (0) target = $region13
    $region12: #{tpu_custom_call.1} parent=1 // pred_region
      _
    $region13: #{tpu_custom_call.1} parent=1 // pred_fallthru
      _
    // Predicated region
    $region14: #{tpu_custom_call.1} parent=1 // pred_check
      _
    $region15: #{tpu_custom_call.1} parent=1 // pred_check_branch
      %43 = sbr.rel (0) target = $region17
    $region16: #{tpu_custom_call.1} parent=1 // pred_region
      %s45 = ssub.s32 1024, 1024
      %46 = vsyncadd [#allocation6], %s45
      %s47 = sshll.u32 [#allocation7], 4
      %s48 = int_to_ptr.vmem [resolvable:$true] %s47
      %53 = dma.hbm_to_vmem [thread:$0]  %s3, 1024, %s48, [#allocation6], 64, 64, 4
    $region17: #{tpu_custom_call.1} parent=1 // pred_fallthru
      _
    // Predicated region
    $region18: #{tpu_custom_call.1} parent=1 // pred_check
      _
    $region19: #{tpu_custom_call.1} parent=1 // pred_check_branch
      %55 = sbr.rel (0) target = $region21
    $region20: #{tpu_custom_call.1} parent=1 // pred_region
      _
    $region21: #{tpu_custom_call.1} parent=1 // pred_fallthru
      _
    // Predicated region
    $region22: #{tpu_custom_call.1} parent=1 // pred_check
      _
    $region23: #{tpu_custom_call.1} parent=1 // pred_check_branch
      %57 = sbr.rel (0) target = $region25
    $region24: #{tpu_custom_call.1} parent=1 // pred_region
      %s59 = ssub.s32 1024, 1024
      %60 = vsyncadd [#allocation9], %s59
      %s61 = sshll.u32 [#allocation8], 4
      %s62 = int_to_ptr.vmem [resolvable:$true] %s61
      %67 = dma.hbm_to_vmem [thread:$0]  %s5, 1024, %s62, [#allocation9], 64, 64, 4
    $region25: #{tpu_custom_call.1} parent=1 // pred_fallthru
      _
    // Predicated region
    $region26: #{tpu_custom_call.1} parent=1 // pred_check
      _
    $region27: #{tpu_custom_call.1} parent=1 // pred_check_branch
      %69 = sbr.rel (0) target = $region29
    $region28: #{tpu_custom_call.1} parent=1 // pred_region
      _
    $region29: #{tpu_custom_call.1} parent=1 // pred_fallthru
      _
    // Predicated region
    $region30: #{tpu_custom_call.1} parent=1 // pred_check
      _
    $region31: #{tpu_custom_call.1} parent=1 // pred_check_branch
      %71 = sbr.rel (0) target = $region33
    $region32: #{tpu_custom_call.1} parent=1 // pred_region
      %72 = dma.done [#allocation3], 1792
    $region33: #{tpu_custom_call.1} parent=1 // pred_fallthru
      _
    // Predicated region
    $region34: #{tpu_custom_call.1} parent=1 // pred_check
      _
    $region35: #{tpu_custom_call.1} parent=1 // pred_check_branch
      %74 = sbr.rel (0) target = $region37
    $region36: #{tpu_custom_call.1} parent=1 // pred_region
      %75 = dma.done [#allocation6], 6272
    $region37: #{tpu_custom_call.1} parent=1 // pred_fallthru
      _
    // Predicated region
    $region38: #{tpu_custom_call.1} parent=1 // pred_check
      _
    $region39: #{tpu_custom_call.1} parent=1 // pred_check_branch
      %77 = sbr.rel (0) target = $region41
    $region40: #{tpu_custom_call.1} parent=1 // pred_region
      %78 = dma.done [#allocation6], 1024
    $region41: #{tpu_custom_call.1} parent=1 // pred_fallthru
      _
    // Predicated region
    $region42: #{tpu_custom_call.1} parent=1 // pred_check
      _
    $region43: #{tpu_custom_call.1} parent=1 // pred_check_branch
      %80 = sbr.rel (0) target = $region45
    $region44: #{tpu_custom_call.1} parent=1 // pred_region
      %81 = dma.done [#allocation9], 1024
    $region45: #{tpu_custom_call.1} parent=1 // pred_fallthru
      _
    %v83 = vld [vmem:[#allocation2] sm:$0xff]
    %v84 = vld [vmem:[#allocation2 + $0x8] sm:$0xff]
    %v85 = vld [vmem:[#allocation2 + $0x10] sm:$0xff]
    %v86 = vld [vmem:[#allocation2 + $0x18] sm:$0xff]
    %v87 = vld [vmem:[#allocation2 + $0x20] sm:$0xff]
    %v88 = vld [vmem:[#allocation2 + $0x28] sm:$0xff]
    %v89 = vld [vmem:[#allocation2 + $0x30] sm:$0xff]
    %v90 = vld [vmem:[#allocation2 + $0x38] sm:$0xff]
    %v91 = vld [vmem:[#allocation2 + $0x40] sm:$0xff]
    %v92 = vld [vmem:[#allocation2 + $0x48] sm:$0xff]
    %v93 = vld [vmem:[#allocation2 + $0x50] sm:$0xff]
    %v94 = vld [vmem:[#allocation2 + $0x58] sm:$0xff]
    %v95 = vld [vmem:[#allocation2 + $0x60] sm:$0xff]
    %v96 = vld [vmem:[#allocation2 + $0x68] sm:$0xff]
    %v97 = vpack.c.bf16 %v90, %v83
    %v98 = vpack.c.bf16 %v91, %v84
    %v99 = vpack.c.bf16 %v92, %v85
    %v100 = vpack.c.bf16 %v93, %v86
    %v101 = vpack.c.bf16 %v94, %v87
    %v102 = vpack.c.bf16 %v95, %v88
    %v103 = vpack.c.bf16 %v96, %v89
    %v104 = vld [vmem:[#allocation5] sm:$0xf]
    %v105 = vld [vmem:[#allocation5 + $0x4] sm:$0xf]
    %v106 = vld [vmem:[#allocation5 + $0x8] sm:$0xf]
    %v107 = vld [vmem:[#allocation5 + $0xc] sm:$0xf]
    %v108 = vld [vmem:[#allocation5 + $0x10] sm:$0xf]
    %v109 = vld [vmem:[#allocation5 + $0x14] sm:$0xf]
    %v110 = vld [vmem:[#allocation5 + $0x18] sm:$0xf]
    %v111 = vld [vmem:[#allocation5 + $0x1c] sm:$0xf]
    %v112 = vld [vmem:[#allocation5 + $0x20] sm:$0xf]
    %v113 = vld [vmem:[#allocation5 + $0x24] sm:$0xf]
    %v114 = vld [vmem:[#allocation5 + $0x28] sm:$0xf]
    %v115 = vld [vmem:[#allocation5 + $0x2c] sm:$0xf]
    %v116 = vld [vmem:[#allocation5 + $0x30] sm:$0xf]
    %v117 = vld [vmem:[#allocation5 + $0x34] sm:$0xf]
    %v118 = vld [vmem:[#allocation5 + $0x38] sm:$0xf]
    %v119 = vld [vmem:[#allocation5 + $0x3c] sm:$0xf]
    %v120 = vld [vmem:[#allocation5 + $0x40] sm:$0xf]
    %v121 = vld [vmem:[#allocation5 + $0x44] sm:$0xf]
    %v122 = vld [vmem:[#allocation5 + $0x48] sm:$0xf]
    %v123 = vld [vmem:[#allocation5 + $0x4c] sm:$0xf]
    %v124 = vld [vmem:[#allocation5 + $0x50] sm:$0xf]
    %v125 = vld [vmem:[#allocation5 + $0x54] sm:$0xf]
    %v126 = vld [vmem:[#allocation5 + $0x58] sm:$0xf]
    %v127 = vld [vmem:[#allocation5 + $0x5c] sm:$0xf]
    %v128 = vld [vmem:[#allocation5 + $0x60] sm:$0xf]
    %v129 = vld [vmem:[#allocation5 + $0x64] sm:$0xf]
    %v130 = vld [vmem:[#allocation5 + $0x68] sm:$0xf]
    %v131 = vld [vmem:[#allocation5 + $0x6c] sm:$0xf]
    %v132 = vld [vmem:[#allocation5 + $0x70] sm:$0xf]
    %v133 = vld [vmem:[#allocation5 + $0x74] sm:$0xf]
    %v134 = vld [vmem:[#allocation5 + $0x78] sm:$0xf]
    %v135 = vld [vmem:[#allocation5 + $0x7c] sm:$0xf]
    %v136 = vld [vmem:[#allocation5 + $0x80] sm:$0xf]
    %v137 = vld [vmem:[#allocation5 + $0x84] sm:$0xf]
    %v138 = vld [vmem:[#allocation5 + $0x88] sm:$0xf]
    %v139 = vld [vmem:[#allocation5 + $0x8c] sm:$0xf]
    %v140 = vld [vmem:[#allocation5 + $0x90] sm:$0xf]
    %v141 = vld [vmem:[#allocation5 + $0x94] sm:$0xf]
    %v142 = vld [vmem:[#allocation5 + $0x98] sm:$0xf]
    %v143 = vld [vmem:[#allocation5 + $0x9c] sm:$0xf]
    %v144 = vld [vmem:[#allocation5 + $0xa0] sm:$0xf]
    %v145 = vld [vmem:[#allocation5 + $0xa4] sm:$0xf]
    %v146 = vld [vmem:[#allocation5 + $0xa8] sm:$0xf]
    %v147 = vld [vmem:[#allocation5 + $0xac] sm:$0xf]
    %v148 = vld [vmem:[#allocation5 + $0xb0] sm:$0xf]
    %v149 = vld [vmem:[#allocation5 + $0xb4] sm:$0xf]
    %v150 = vld [vmem:[#allocation5 + $0xb8] sm:$0xf]
    %v151 = vld [vmem:[#allocation5 + $0xbc] sm:$0xf]
    %v152 = vld [vmem:[#allocation5 + $0xc0] sm:$0xf]
    %v153 = vld [vmem:[#allocation5 + $0xc4] sm:$0xf]
    %v154 = vld [vmem:[#allocation5 + $0xc8] sm:$0xf]
    %v155 = vld [vmem:[#allocation5 + $0xcc] sm:$0xf]
    %v156 = vld [vmem:[#allocation5 + $0xd0] sm:$0xf]
    %v157 = vld [vmem:[#allocation5 + $0xd4] sm:$0xf]
    %v158 = vld [vmem:[#allocation5 + $0xd8] sm:$0xf]
    %v159 = vld [vmem:[#allocation5 + $0xdc] sm:$0xf]
    %v160 = vld [vmem:[#allocation5 + $0xe0] sm:$0xf]
    %v161 = vld [vmem:[#allocation5 + $0xe4] sm:$0xf]
    %v162 = vld [vmem:[#allocation5 + $0xe8] sm:$0xf]
    %v163 = vld [vmem:[#allocation5 + $0xec] sm:$0xf]
    %v164 = vld [vmem:[#allocation5 + $0xf0] sm:$0xf]
    %v165 = vld [vmem:[#allocation5 + $0xf4] sm:$0xf]
    %v166 = vld [vmem:[#allocation5 + $0xf8] sm:$0xf]
    %v167 = vld [vmem:[#allocation5 + $0xfc] sm:$0xf]
    %v168 = vld [vmem:[#allocation5 + $0x100] sm:$0xf]
    %v169 = vld [vmem:[#allocation5 + $0x104] sm:$0xf]
    %v170 = vld [vmem:[#allocation5 + $0x108] sm:$0xf]
    %v171 = vld [vmem:[#allocation5 + $0x10c] sm:$0xf]
    %v172 = vld [vmem:[#allocation5 + $0x110] sm:$0xf]
    %v173 = vld [vmem:[#allocation5 + $0x114] sm:$0xf]
    %v174 = vld [vmem:[#allocation5 + $0x118] sm:$0xf]
    %v175 = vld [vmem:[#allocation5 + $0x11c] sm:$0xf]
    %v176 = vld [vmem:[#allocation5 + $0x120] sm:$0xf]
    %v177 = vld [vmem:[#allocation5 + $0x124] sm:$0xf]
    %v178 = vld [vmem:[#allocation5 + $0x128] sm:$0xf]
    %v179 = vld [vmem:[#allocation5 + $0x12c] sm:$0xf]
    %v180 = vld [vmem:[#allocation5 + $0x130] sm:$0xf]
    %v181 = vld [vmem:[#allocation5 + $0x134] sm:$0xf]
    %v182 = vld [vmem:[#allocation5 + $0x138] sm:$0xf]
    %v183 = vld [vmem:[#allocation5 + $0x13c] sm:$0xf]
    %v184 = vld [vmem:[#allocation5 + $0x140] sm:$0xf]
    %v185 = vld [vmem:[#allocation5 + $0x144] sm:$0xf]
    %v186 = vld [vmem:[#allocation5 + $0x148] sm:$0xf]
    %v187 = vld [vmem:[#allocation5 + $0x14c] sm:$0xf]
    %v188 = vld [vmem:[#allocation5 + $0x150] sm:$0xf]
    %v189 = vld [vmem:[#allocation5 + $0x154] sm:$0xf]
    %v190 = vld [vmem:[#allocation5 + $0x158] sm:$0xf]
    %v191 = vld [vmem:[#allocation5 + $0x15c] sm:$0xf]
    %v192 = vld [vmem:[#allocation5 + $0x160] sm:$0xf]
    %v193 = vld [vmem:[#allocation5 + $0x164] sm:$0xf]
    %v194 = vld [vmem:[#allocation5 + $0x168] sm:$0xf]
    %v195 = vld [vmem:[#allocation5 + $0x16c] sm:$0xf]
    %v196 = vld [vmem:[#allocation5 + $0x170] sm:$0xf]
    %v197 = vld [vmem:[#allocation5 + $0x174] sm:$0xf]
    %v198 = vld [vmem:[#allocation5 + $0x178] sm:$0xf]
    %v199 = vld [vmem:[#allocation5 + $0x17c] sm:$0xf]
    %v200 = vld [vmem:[#allocation5 + $0x180] sm:$0xf]
    %v201 = vld [vmem:[#allocation5 + $0x184] sm:$0xf]
    %v202 = vld [vmem:[%s2] sm:$0x1]
    %v204 = vlaneseq
    %v205 = vshrl.u32 %v204, 7
    %v206 = vsub.s32 0, %v205
    %v207 = vrot.slane %v202, %v206
    %v307 = vunpack.c.l.b16 %v104
    %v308 = vunpack.c.l.b16 %v105
    %v309 = vunpack.c.l.b16 %v106
    %v310 = vunpack.c.l.b16 %v107
    %v311 = vunpack.c.l.b16 %v108
    %v312 = vunpack.c.l.b16 %v109
    %v313 = vunpack.c.l.b16 %v110
    %v314 = vunpack.c.l.b16 %v111
    %v315 = vunpack.c.l.b16 %v112
    %v316 = vunpack.c.l.b16 %v113
    %v317 = vunpack.c.l.b16 %v114
    %v318 = vunpack.c.l.b16 %v115
    %v319 = vunpack.c.l.b16 %v116
    %v320 = vunpack.c.l.b16 %v117
    %v321 = vunpack.c.l.b16 %v118
    %v322 = vunpack.c.l.b16 %v119
    %v323 = vunpack.c.l.b16 %v120
    %v324 = vunpack.c.l.b16 %v121
    %v325 = vunpack.c.l.b16 %v122
    %v326 = vunpack.c.l.b16 %v123
    %v327 = vunpack.c.l.b16 %v124
    %v328 = vunpack.c.l.b16 %v125
    %v329 = vunpack.c.l.b16 %v126
    %v330 = vunpack.c.l.b16 %v127
    %v331 = vunpack.c.l.b16 %v128
    %v332 = vunpack.c.l.b16 %v129
    %v333 = vunpack.c.l.b16 %v130
    %v334 = vunpack.c.l.b16 %v131
    %v335 = vunpack.c.l.b16 %v132
    %v336 = vunpack.c.l.b16 %v133
    %v337 = vunpack.c.l.b16 %v134
    %v338 = vunpack.c.l.b16 %v135
    %v339 = vunpack.c.l.b16 %v136
    %v340 = vunpack.c.l.b16 %v137
    %v341 = vunpack.c.l.b16 %v138
    %v342 = vunpack.c.l.b16 %v139
    %v343 = vunpack.c.l.b16 %v140
    %v344 = vunpack.c.l.b16 %v141
    %v345 = vunpack.c.l.b16 %v142
    %v346 = vunpack.c.l.b16 %v143
    %v347 = vunpack.c.l.b16 %v144
    %v348 = vunpack.c.l.b16 %v145
    %v349 = vunpack.c.l.b16 %v146
    %v350 = vunpack.c.l.b16 %v147
    %v351 = vunpack.c.l.b16 %v148
    %v352 = vunpack.c.l.b16 %v149
    %v353 = vunpack.c.l.b16 %v150
    %v354 = vunpack.c.l.b16 %v151
    %v355 = vunpack.c.l.b16 %v152
    %v356 = vunpack.c.l.b16 %v153
    %v357 = vunpack.c.l.b16 %v154
    %v358 = vunpack.c.l.b16 %v155
    %v359 = vunpack.c.l.b16 %v156
    %v360 = vunpack.c.l.b16 %v157
    %v361 = vunpack.c.l.b16 %v158
    %v362 = vunpack.c.l.b16 %v159
    %v363 = vunpack.c.l.b16 %v160
    %v364 = vunpack.c.l.b16 %v161
    %v365 = vunpack.c.l.b16 %v162
    %v366 = vunpack.c.l.b16 %v163
    %v367 = vunpack.c.l.b16 %v164
    %v368 = vunpack.c.l.b16 %v165
    %v369 = vunpack.c.l.b16 %v166
    %v370 = vunpack.c.l.b16 %v167
    %v371 = vunpack.c.l.b16 %v168
    %v372 = vunpack.c.l.b16 %v169
    %v373 = vunpack.c.l.b16 %v170
    %v374 = vunpack.c.l.b16 %v171
    %v375 = vunpack.c.l.b16 %v172
    %v376 = vunpack.c.l.b16 %v173
    %v377 = vunpack.c.l.b16 %v174
    %v378 = vunpack.c.l.b16 %v175
    %v379 = vunpack.c.l.b16 %v176
    %v380 = vunpack.c.l.b16 %v177
    %v381 = vunpack.c.l.b16 %v178
    %v382 = vunpack.c.l.b16 %v179
    %v383 = vunpack.c.l.b16 %v180
    %v384 = vunpack.c.l.b16 %v181
    %v385 = vunpack.c.l.b16 %v182
    %v386 = vunpack.c.l.b16 %v183
    %v387 = vunpack.c.l.b16 %v184
    %v388 = vunpack.c.l.b16 %v185
    %v389 = vunpack.c.l.b16 %v186
    %v390 = vunpack.c.l.b16 %v187
    %v391 = vunpack.c.l.b16 %v188
    %v392 = vunpack.c.l.b16 %v189
    %v393 = vunpack.c.l.b16 %v190
    %v394 = vunpack.c.l.b16 %v191
    %v395 = vunpack.c.l.b16 %v192
    %v396 = vunpack.c.l.b16 %v193
    %v397 = vunpack.c.l.b16 %v194
    %v398 = vunpack.c.l.b16 %v195
    %v399 = vunpack.c.l.b16 %v196
    %v400 = vunpack.c.l.b16 %v197
    %v401 = vunpack.c.l.b16 %v198
    %v402 = vunpack.c.l.b16 %v199
    %v403 = vunpack.c.l.b16 %v200
    %v404 = vunpack.c.l.b16 %v201
    %v405 = vpack.c.b16 %v308, %v307
    %v406 = vpack.c.b16 %v310, %v309
    %v407 = vpack.c.b16 %v312, %v311
    %v408 = vpack.c.b16 %v314, %v313
    %v409 = vpack.c.b16 %v316, %v315
    %v410 = vpack.c.b16 %v318, %v317
    %v411 = vpack.c.b16 %v320, %v319
    %v412 = vpack.c.b16 %v322, %v321
    %v413 = vpack.c.b16 %v324, %v323
    %v414 = vpack.c.b16 %v326, %v325
    %v415 = vpack.c.b16 %v328, %v327
    %v416 = vpack.c.b16 %v330, %v329
    %v417 = vpack.c.b16 %v332, %v331
    %v418 = vpack.c.b16 %v334, %v333
    %v419 = vpack.c.b16 %v336, %v335
    %v420 = vpack.c.b16 %v338, %v337
    %v421 = vpack.c.b16 %v340, %v339
    %v422 = vpack.c.b16 %v342, %v341
    %v423 = vpack.c.b16 %v344, %v343
    %v424 = vpack.c.b16 %v346, %v345
    %v425 = vpack.c.b16 %v348, %v347
    %v426 = vpack.c.b16 %v350, %v349
    %v427 = vpack.c.b16 %v352, %v351
    %v428 = vpack.c.b16 %v354, %v353
    %v429 = vpack.c.b16 %v356, %v355
    %v430 = vpack.c.b16 %v358, %v357
    %v431 = vpack.c.b16 %v360, %v359
    %v432 = vpack.c.b16 %v362, %v361
    %v433 = vpack.c.b16 %v364, %v363
    %v434 = vpack.c.b16 %v366, %v365
    %v435 = vpack.c.b16 %v368, %v367
    %v436 = vpack.c.b16 %v370, %v369
    %v437 = vpack.c.b16 %v372, %v371
    %v438 = vpack.c.b16 %v374, %v373
    %v439 = vpack.c.b16 %v376, %v375
    %v440 = vpack.c.b16 %v378, %v377
    %v441 = vpack.c.b16 %v380, %v379
    %v442 = vpack.c.b16 %v382, %v381
    %v443 = vpack.c.b16 %v384, %v383
    %v444 = vpack.c.b16 %v386, %v385
    %v445 = vpack.c.b16 %v388, %v387
    %v446 = vpack.c.b16 %v390, %v389
    %v447 = vpack.c.b16 %v392, %v391
    %v448 = vpack.c.b16 %v394, %v393
    %v449 = vpack.c.b16 %v396, %v395
    %v450 = vpack.c.b16 %v398, %v397
    %v451 = vpack.c.b16 %v400, %v399
    %v452 = vpack.c.b16 %v402, %v401
    %v453 = vpack.c.b16 %v404, %v403
    %vm503 = vcmask 130048
    %v505 = vsel %vm503, %v103, 0
    %507 = vmatprep.subr.bf16.mxu0 0
    %508 = vmatpush1.bf16.msra.mxu0 %v405
    %509 = vmatprep.subr.bf16.mxu0 0
    %510 = vmatpush1.bf16.msra.mxu0 %v406
    %511 = vmatprep.subr.bf16.mxu0 0
    %512 = vmatpush1.bf16.msra.mxu0 %v407
    %513 = vmatprep.subr.bf16.mxu0 0
    %514 = vmatpush1.bf16.msra.mxu0 %v408
    %515 = vmatprep.subr.bf16.mxu0 0
    %516 = vmatpush1.bf16.msra.mxu0 %v409
    %517 = vmatprep.subr.bf16.mxu0 0
    %518 = vmatpush1.bf16.msra.mxu0 %v410
    %519 = vmatprep.subr.bf16.mxu0 0
    %520 = vmatpush1.bf16.msra.mxu0 %v411
    %521 = vmatprep.subr.bf16.mxu0 0
    %522 = vmatpush1.bf16.msra.mxu0 %v412
    %523 = vmatprep.subr.bf16.mxu0 0
    %524 = vmatpush1.bf16.msra.mxu0 %v413
    %525 = vmatprep.subr.bf16.mxu0 0
    %526 = vmatpush1.bf16.msra.mxu0 %v414
    %527 = vmatprep.subr.bf16.mxu0 0
    %528 = vmatpush1.bf16.msra.mxu0 %v415
    %529 = vmatprep.subr.bf16.mxu0 0
    %530 = vmatpush1.bf16.msra.mxu0 %v416
    %531 = vmatprep.subr.bf16.mxu0 0
    %532 = vmatpush1.bf16.msra.mxu0 %v417
    %533 = vmatprep.subr.bf16.mxu0 0
    %534 = vmatpush1.bf16.msra.mxu0 %v418
    %535 = vmatprep.subr.bf16.mxu0 0
    %536 = vmatpush1.bf16.msra.mxu0 %v419
    %537 = vmatprep.subr.bf16.mxu0 0
    %538 = vmatpush1.bf16.msra.mxu0 %v420
    %539 = vmatprep.mubr.bf16.mxu0 %v98
    %540 = vmatmul.mubr.bf16.gmra.mrb[0].mxu0 %v97
    %v541 = vpop.f32.mrb[0].mxu0
    %v542 = vadd.f32 %v207, %v541
    %v543 = vpop.f32.mrb[0].mxu0
    %v544 = vpop.f32.mrb[0].mxu0
    %v545 = vadd.f32 %v207, %v544
    %v546 = vpop.f32.mrb[0].mxu0
    %547 = vdwg.mxu0
    %548 = vmatprep.subr.bf16.mxu0 0
    %549 = vmatpush1.bf16.msra.mxu0 %v421
    %550 = vmatprep.subr.bf16.mxu0 0
    %551 = vmatpush1.bf16.msra.mxu0 %v422
    %552 = vmatprep.subr.bf16.mxu0 0
    %553 = vmatpush1.bf16.msra.mxu0 %v423
    %554 = vmatprep.subr.bf16.mxu0 0
    %555 = vmatpush1.bf16.msra.mxu0 %v424
    %556 = vmatprep.subr.bf16.mxu0 0
    %557 = vmatpush1.bf16.msra.mxu0 %v425
    %558 = vmatprep.subr.bf16.mxu0 0
    %559 = vmatpush1.bf16.msra.mxu0 %v426
    %560 = vmatprep.subr.bf16.mxu0 0
    %561 = vmatpush1.bf16.msra.mxu0 %v427
    %562 = vmatprep.subr.bf16.mxu0 0
    %563 = vmatpush1.bf16.msra.mxu0 %v428
    %564 = vmatprep.subr.bf16.mxu0 0
    %565 = vmatpush1.bf16.msra.mxu0 %v429
    %566 = vmatprep.subr.bf16.mxu0 0
    %567 = vmatpush1.bf16.msra.mxu0 %v430
    %568 = vmatprep.subr.bf16.mxu0 0
    %569 = vmatpush1.bf16.msra.mxu0 %v431
    %570 = vmatprep.subr.bf16.mxu0 0
    %571 = vmatpush1.bf16.msra.mxu0 %v432
    %572 = vmatprep.subr.bf16.mxu0 0
    %573 = vmatpush1.bf16.msra.mxu0 %v433
    %574 = vmatprep.subr.bf16.mxu0 0
    %575 = vmatpush1.bf16.msra.mxu0 %v434
    %576 = vmatprep.subr.bf16.mxu0 0
    %577 = vmatpush1.bf16.msra.mxu0 %v435
    %578 = vmatprep.subr.bf16.mxu0 0
    %579 = vmatpush1.bf16.msra.mxu0 %v436
    %580 = vmatprep.mubr.bf16.mxu0 %v100
    %581 = vmatmul.mubr.bf16.gmra.mrb[0].mxu0 %v99
    %v582 = vpop.f32.mrb[0].mxu0
    %v583 = vadd.f32 %v542, %v582
    %v584 = vpop.f32.mrb[0].mxu0
    %v585 = vpop.f32.mrb[0].mxu0
    %v586 = vadd.f32 %v545, %v585
    %v587 = vpop.f32.mrb[0].mxu0
    %588 = vdwg.mxu0
    %589 = vmatprep.subr.bf16.mxu0 0
    %590 = vmatpush1.bf16.msra.mxu0 %v437
    %591 = vmatprep.subr.bf16.mxu0 0
    %592 = vmatpush1.bf16.msra.mxu0 %v438
    %593 = vmatprep.subr.bf16.mxu0 0
    %594 = vmatpush1.bf16.msra.mxu0 %v439
    %595 = vmatprep.subr.bf16.mxu0 0
    %596 = vmatpush1.bf16.msra.mxu0 %v440
    %597 = vmatprep.subr.bf16.mxu0 0
    %598 = vmatpush1.bf16.msra.mxu0 %v441
    %599 = vmatprep.subr.bf16.mxu0 0
    %600 = vmatpush1.bf16.msra.mxu0 %v442
    %601 = vmatprep.subr.bf16.mxu0 0
    %602 = vmatpush1.bf16.msra.mxu0 %v443
    %603 = vmatprep.subr.bf16.mxu0 0
    %604 = vmatpush1.bf16.msra.mxu0 %v444
    %605 = vmatprep.subr.bf16.mxu0 0
    %606 = vmatpush1.bf16.msra.mxu0 %v445
    %607 = vmatprep.subr.bf16.mxu0 0
    %608 = vmatpush1.bf16.msra.mxu0 %v446
    %609 = vmatprep.subr.bf16.mxu0 0
    %610 = vmatpush1.bf16.msra.mxu0 %v447
    %611 = vmatprep.subr.bf16.mxu0 0
    %612 = vmatpush1.bf16.msra.mxu0 %v448
    %613 = vmatprep.subr.bf16.mxu0 0
    %614 = vmatpush1.bf16.msra.mxu0 %v449
    %615 = vmatprep.subr.bf16.mxu0 0
    %616 = vmatpush1.bf16.msra.mxu0 %v450
    %617 = vmatprep.subr.bf16.mxu0 0
    %618 = vmatpush1.bf16.msra.mxu0 %v451
    %619 = vmatprep.subr.bf16.mxu0 0
    %620 = vmatpush1.bf16.msra.mxu0 %v452
    %621 = vmatprep.mubr.bf16.mxu0 %v102
    %622 = vmatmul.mubr.bf16.gmra.mrb[0].mxu0 %v101
    %v623 = vpop.f32.mrb[0].mxu0
    %v624 = vadd.f32 %v583, %v623
    %v625 = vpop.f32.mrb[0].mxu0
    %v626 = vpop.f32.mrb[0].mxu0
    %v627 = vadd.f32 %v586, %v626
    %v628 = vpop.f32.mrb[0].mxu0
    %629 = vdwg.mxu0
    %630 = vmatprep.subr.bf16.mxu0 0
    %631 = vmatpush1.bf16.msra.mxu0 %v453
    %632 = vmatprep.subr.bf16.mxu0 0
    %633 = vmatpush1.bf16.msra.mxu0 0
    %634 = vmatprep.subr.bf16.mxu0 0
    %635 = vmatpush1.bf16.msra.mxu0 0
    %636 = vmatprep.subr.bf16.mxu0 0
    %637 = vmatpush1.bf16.msra.mxu0 0
    %638 = vmatprep.subr.bf16.mxu0 0
    %639 = vmatpush1.bf16.msra.mxu0 0
    %640 = vmatprep.subr.bf16.mxu0 0
    %641 = vmatpush1.bf16.msra.mxu0 0
    %642 = vmatprep.subr.bf16.mxu0 0
    %643 = vmatpush1.bf16.msra.mxu0 0
    %644 = vmatprep.subr.bf16.mxu0 0
    %645 = vmatpush1.bf16.msra.mxu0 0
    %646 = vmatprep.subr.bf16.mxu0 0
    %647 = vmatpush1.bf16.msra.mxu0 0
    %648 = vmatprep.subr.bf16.mxu0 0
    %649 = vmatpush1.bf16.msra.mxu0 0
    %650 = vmatprep.subr.bf16.mxu0 0
    %651 = vmatpush1.bf16.msra.mxu0 0
    %652 = vmatprep.subr.bf16.mxu0 0
    %653 = vmatpush1.bf16.msra.mxu0 0
    %654 = vmatprep.subr.bf16.mxu0 0
    %655 = vmatpush1.bf16.msra.mxu0 0
    %656 = vmatprep.subr.bf16.mxu0 0
    %657 = vmatpush1.bf16.msra.mxu0 0
    %658 = vmatprep.subr.bf16.mxu0 0
    %659 = vmatpush1.bf16.msra.mxu0 0
    %660 = vmatprep.subr.bf16.mxu0 0
    %661 = vmatpush1.bf16.msra.mxu0 0
    %662 = vmatprep.mubr.bf16.mxu0 0
    %663 = vmatmul.mubr.bf16.gmra.mrb[0].mxu0 %v505
    %v664 = vpop.f32.mrb[0].mxu0
    %v665 = vadd.f32 %v624, %v664
    %v666 = vpop.f32.mrb[0].mxu0
    %v667 = vpop.f32.mrb[0].mxu0
    %v668 = vadd.f32 %v627, %v667
    %v669 = vpop.f32.mrb[0].mxu0
    %670 = vdwg.mxu0
    %v671 = vmax.f32 %v665, 0.0
    %v672 = vmax.f32 %v668, 0.0
    %v673 = vpack.c.bf16 %v672, %v671
    %v674 = vld [vmem:[#allocation7] sm:$0xf]
    %v675 = vld [vmem:[#allocation7 + $0x4] sm:$0xf]
    %v676 = vld [vmem:[#allocation7 + $0x8] sm:$0xf]
    %v677 = vld [vmem:[#allocation7 + $0xc] sm:$0xf]
    %v678 = vld [vmem:[#allocation7 + $0x10] sm:$0xf]
    %v679 = vld [vmem:[#allocation7 + $0x14] sm:$0xf]
    %v680 = vld [vmem:[#allocation7 + $0x18] sm:$0xf]
    %v681 = vld [vmem:[#allocation7 + $0x1c] sm:$0xf]
    %v682 = vld [vmem:[#allocation7 + $0x20] sm:$0xf]
    %v683 = vld [vmem:[#allocation7 + $0x24] sm:$0xf]
    %v684 = vld [vmem:[#allocation7 + $0x28] sm:$0xf]
    %v685 = vld [vmem:[#allocation7 + $0x2c] sm:$0xf]
    %v686 = vld [vmem:[#allocation7 + $0x30] sm:$0xf]
    %v687 = vld [vmem:[#allocation7 + $0x34] sm:$0xf]
    %v688 = vld [vmem:[#allocation7 + $0x38] sm:$0xf]
    %v689 = vld [vmem:[#allocation7 + $0x3c] sm:$0xf]
    %v690 = vld [vmem:[%s4] sm:$0x1]
    %v692 = vlaneseq
    %v693 = vshrl.u32 %v692, 7
    %v694 = vsub.s32 0, %v693
    %v695 = vrot.slane %v690, %v694
    %v713 = vunpack.c.l.b16 %v674
    %v714 = vunpack.c.l.b16 %v675
    %v715 = vunpack.c.l.b16 %v676
    %v716 = vunpack.c.l.b16 %v677
    %v717 = vunpack.c.l.b16 %v678
    %v718 = vunpack.c.l.b16 %v679
    %v719 = vunpack.c.l.b16 %v680
    %v720 = vunpack.c.l.b16 %v681
    %v721 = vunpack.c.l.b16 %v682
    %v722 = vunpack.c.l.b16 %v683
    %v723 = vunpack.c.l.b16 %v684
    %v724 = vunpack.c.l.b16 %v685
    %v725 = vunpack.c.l.b16 %v686
    %v726 = vunpack.c.l.b16 %v687
    %v727 = vunpack.c.l.b16 %v688
    %v728 = vunpack.c.l.b16 %v689
    %v729 = vpack.c.b16 %v714, %v713
    %v730 = vpack.c.b16 %v716, %v715
    %v731 = vpack.c.b16 %v718, %v717
    %v732 = vpack.c.b16 %v720, %v719
    %v733 = vpack.c.b16 %v722, %v721
    %v734 = vpack.c.b16 %v724, %v723
    %v735 = vpack.c.b16 %v726, %v725
    %v736 = vpack.c.b16 %v728, %v727
    %745 = vmatprep.subr.bf16.mxu0 0
    %746 = vmatpush1.bf16.msra.mxu0 %v729
    %747 = vmatprep.subr.bf16.mxu0 0
    %748 = vmatpush1.bf16.msra.mxu0 %v730
    %749 = vmatprep.subr.bf16.mxu0 0
    %750 = vmatpush1.bf16.msra.mxu0 %v731
    %751 = vmatprep.subr.bf16.mxu0 0
    %752 = vmatpush1.bf16.msra.mxu0 %v732
    %753 = vmatprep.subr.bf16.mxu0 0
    %754 = vmatpush1.bf16.msra.mxu0 %v733
    %755 = vmatprep.subr.bf16.mxu0 0
    %756 = vmatpush1.bf16.msra.mxu0 %v734
    %757 = vmatprep.subr.bf16.mxu0 0
    %758 = vmatpush1.bf16.msra.mxu0 %v735
    %759 = vmatprep.subr.bf16.mxu0 0
    %760 = vmatpush1.bf16.msra.mxu0 %v736
    %761 = vmatprep.subr.bf16.mxu0 0
    %762 = vmatpush1.bf16.msra.mxu0 0
    %763 = vmatprep.subr.bf16.mxu0 0
    %764 = vmatpush1.bf16.msra.mxu0 0
    %765 = vmatprep.subr.bf16.mxu0 0
    %766 = vmatpush1.bf16.msra.mxu0 0
    %767 = vmatprep.subr.bf16.mxu0 0
    %768 = vmatpush1.bf16.msra.mxu0 0
    %769 = vmatprep.subr.bf16.mxu0 0
    %770 = vmatpush1.bf16.msra.mxu0 0
    %771 = vmatprep.subr.bf16.mxu0 0
    %772 = vmatpush1.bf16.msra.mxu0 0
    %773 = vmatprep.subr.bf16.mxu0 0
    %774 = vmatpush1.bf16.msra.mxu0 0
    %775 = vmatprep.subr.bf16.mxu0 0
    %776 = vmatpush1.bf16.msra.mxu0 0
    %777 = vmatprep.mubr.bf16.mxu0 0
    %778 = vmatmul.mubr.bf16.gmra.mrb[0].mxu0 %v673
    %v779 = vpop.f32.mrb[0].mxu0
    %v780 = vadd.f32 %v695, %v779
    %v781 = vpop.f32.mrb[0].mxu0
    %v782 = vpop.f32.mrb[0].mxu0
    %v783 = vadd.f32 %v695, %v782
    %v784 = vpop.f32.mrb[0].mxu0
    %785 = vdwg.mxu0
    %v786 = vmax.f32 %v780, 0.0
    %v787 = vmax.f32 %v783, 0.0
    %v788 = vpack.c.bf16 %v787, %v786
    %v789 = vld [vmem:[#allocation8] sm:$0xf]
    %v790 = vld [vmem:[#allocation8 + $0x4] sm:$0xf]
    %v791 = vld [vmem:[#allocation8 + $0x8] sm:$0xf]
    %v792 = vld [vmem:[#allocation8 + $0xc] sm:$0xf]
    %v793 = vld [vmem:[#allocation8 + $0x10] sm:$0xf]
    %v794 = vld [vmem:[#allocation8 + $0x14] sm:$0xf]
    %v795 = vld [vmem:[#allocation8 + $0x18] sm:$0xf]
    %v796 = vld [vmem:[#allocation8 + $0x1c] sm:$0xf]
    %v797 = vld [vmem:[#allocation8 + $0x20] sm:$0xf]
    %v798 = vld [vmem:[#allocation8 + $0x24] sm:$0xf]
    %v799 = vld [vmem:[#allocation8 + $0x28] sm:$0xf]
    %v800 = vld [vmem:[#allocation8 + $0x2c] sm:$0xf]
    %v801 = vld [vmem:[#allocation8 + $0x30] sm:$0xf]
    %v802 = vld [vmem:[#allocation8 + $0x34] sm:$0xf]
    %v803 = vld [vmem:[#allocation8 + $0x38] sm:$0xf]
    %v804 = vld [vmem:[#allocation8 + $0x3c] sm:$0xf]
    %v805 = vld [vmem:[%s6] sm:$0x1]
    %v807 = vlaneseq
    %v808 = vshrl.u32 %v807, 7
    %v809 = vsub.s32 0, %v808
    %v810 = vrot.slane %v805, %v809
    %v828 = vunpack.c.l.b16 %v789
    %v829 = vunpack.c.l.b16 %v790
    %v830 = vunpack.c.l.b16 %v791
    %v831 = vunpack.c.l.b16 %v792
    %v832 = vunpack.c.l.b16 %v793
    %v833 = vunpack.c.l.b16 %v794
    %v834 = vunpack.c.l.b16 %v795
    %v835 = vunpack.c.l.b16 %v796
    %v836 = vunpack.c.l.b16 %v797
    %v837 = vunpack.c.l.b16 %v798
    %v838 = vunpack.c.l.b16 %v799
    %v839 = vunpack.c.l.b16 %v800
    %v840 = vunpack.c.l.b16 %v801
    %v841 = vunpack.c.l.b16 %v802
    %v842 = vunpack.c.l.b16 %v803
    %v843 = vunpack.c.l.b16 %v804
    %v844 = vpack.c.b16 %v829, %v828
    %v845 = vpack.c.b16 %v831, %v830
    %v846 = vpack.c.b16 %v833, %v832
    %v847 = vpack.c.b16 %v835, %v834
    %v848 = vpack.c.b16 %v837, %v836
    %v849 = vpack.c.b16 %v839, %v838
    %v850 = vpack.c.b16 %v841, %v840
    %v851 = vpack.c.b16 %v843, %v842
    %860 = vmatprep.subr.bf16.mxu0 0
    %861 = vmatpush1.bf16.msra.mxu0 %v844
    %862 = vmatprep.subr.bf16.mxu0 0
    %863 = vmatpush1.bf16.msra.mxu0 %v845
    %864 = vmatprep.subr.bf16.mxu0 0
    %865 = vmatpush1.bf16.msra.mxu0 %v846
    %866 = vmatprep.subr.bf16.mxu0 0
    %867 = vmatpush1.bf16.msra.mxu0 %v847
    %868 = vmatprep.subr.bf16.mxu0 0
    %869 = vmatpush1.bf16.msra.mxu0 %v848
    %870 = vmatprep.subr.bf16.mxu0 0
    %871 = vmatpush1.bf16.msra.mxu0 %v849
    %872 = vmatprep.subr.bf16.mxu0 0
    %873 = vmatpush1.bf16.msra.mxu0 %v850
    %874 = vmatprep.subr.bf16.mxu0 0
    %875 = vmatpush1.bf16.msra.mxu0 %v851
    %876 = vmatprep.subr.bf16.mxu0 0
    %877 = vmatpush1.bf16.msra.mxu0 0
    %878 = vmatprep.subr.bf16.mxu0 0
    %879 = vmatpush1.bf16.msra.mxu0 0
    %880 = vmatprep.subr.bf16.mxu0 0
    %881 = vmatpush1.bf16.msra.mxu0 0
    %882 = vmatprep.subr.bf16.mxu0 0
    %883 = vmatpush1.bf16.msra.mxu0 0
    %884 = vmatprep.subr.bf16.mxu0 0
    %885 = vmatpush1.bf16.msra.mxu0 0
    %886 = vmatprep.subr.bf16.mxu0 0
    %887 = vmatpush1.bf16.msra.mxu0 0
    %888 = vmatprep.subr.bf16.mxu0 0
    %889 = vmatpush1.bf16.msra.mxu0 0
    %890 = vmatprep.subr.bf16.mxu0 0
    %891 = vmatpush1.bf16.msra.mxu0 0
    %892 = vmatprep.mubr.bf16.mxu0 0
    %893 = vmatmul.mubr.bf16.gmra.mrb[0].mxu0 %v788
    %v894 = vpop.f32.mrb[0].mxu0
    %v895 = vadd.f32 %v810, %v894
    %v896 = vpop.f32.mrb[0].mxu0
    %v897 = vpop.f32.mrb[0].mxu0
    %v898 = vadd.f32 %v810, %v897
    %v899 = vpop.f32.mrb[0].mxu0
    %900 = vdwg.mxu0
    %v901 = vmax.f32 %v895, 0.0
    %v902 = vmax.f32 %v898, 0.0
    %v903 = vlaneseq
    %v904 = vand.u32 %v903, 127
    %vm905 = vcmp.lt.s32.totalorder %v904, 10
    %v906 = vsel %vm905, %v901, -inf
    %v907 = vsel %vm905, %v902, -inf
    %908 = vmax.xlane.f32.xlu0 %v906
    %v909 = vpop.xlane.xlu0 %908
    %910 = vmax.xlane.f32.xlu0 %v907
    %v911 = vpop.xlane.xlu0 %910
    %v912 = vsub.f32 %v906, %v909
    %v913 = vsub.f32 %v907, %v911
    %v914 = vmul.f32 %v912, 1.442695
    %v915 = vpow.pop %v914
    %v916 = vmul.f32 %v913, 1.442695
    %v917 = vpow.pop %v916
    %918 = vadd.xlane.f32.xlu0 %v915
    %v919 = vpop.xlane.xlu0 %918
    %920 = vadd.xlane.f32.xlu0 %v917
    %v921 = vpop.xlane.xlu0 %920
    %v922 = vrcp.pop %v919
    %v923 = vrcp.pop %v921
    %v924 = vmul.f32 %v915, %v922
    %v925 = vmul.f32 %v917, %v923
    %v926 = vpack.c.bf16 %v925, %v924
    %v928 = vunpack.c.l.b16 %v926
    %v929 = vunpack.c.h.b16 %v926
    %v930 = vpack.c.b16 %v928, %v928
    %v931 = vpack.c.b16 %v929, %v929
    %934 = vst [vmem:[#allocation10] sm:$0xf] %v930
    %935 = vst [vmem:[#allocation10 + $0x4] sm:$0xf] %v931
    // Predicated region
    $region46: #{tpu_custom_call.1} parent=1 // pred_check
      _
    $region47: #{tpu_custom_call.1} parent=1 // pred_check_branch
      %937 = sbr.rel (0) target = $region49
    $region48: #{tpu_custom_call.1} parent=1 // pred_region
      %s939 = ssub.s32 128, 64
      %940 = vsyncadd [#allocation4], %s939
      %s941 = sshll.u32 [#allocation10], 4
      %s942 = int_to_ptr.vmem [resolvable:$true] %s941
      %947 = dma.vmem_to_hbm [thread:$0]  %s942, 64, %s7, [#allocation4], 64, 64, 4
    $region49: #{tpu_custom_call.1} parent=1 // pred_fallthru
      _
    // Predicated region
    $region50: #{tpu_custom_call.1} parent=1 // pred_check
      _
    $region51: #{tpu_custom_call.1} parent=1 // pred_check_branch
      %949 = sbr.rel (0) target = $region53
    $region52: #{tpu_custom_call.1} parent=1 // pred_region
      %950 = dma.done [#allocation4], 128
    $region53: #{tpu_custom_call.1} parent=1 // pred_fallthru
      _
    %951 = vsyncpa [#allocation3], 1
    %952 = vsyncpa [#allocation6], 1
    %953 = vsyncpa [#allocation9], 1
    %954 = vsyncpa [#allocation4], 1

</llo_original>
